<compile_context>
chip_gen: v7x
topology: tpu7x:2x2x1
jax: 0.10.0
libtpu: 0.0.40
codegen_flags: <defaults>
</compile_context>

<pallas_src>
import math

import jax
import jax.numpy as jnp
from jax.experimental import pallas as pl
from jax.experimental.pallas import tpu as pltpu


def timestep_embedder_kernel(t_ref, freqs_ref, w1_ref, b1_ref, w2_ref, b2_ref,
                             out_ref):
    # t_ref:     (tile_n, 1)   timesteps for this tile (f32)
    # freqs_ref: (1, half)     sinusoid frequencies (f32)
    # w1_ref:    (D, H)        first Linear weight, input-major (bf16 or f32)
    # b1_ref:    (1, H)        f32
    # w2_ref:    (H, H)        second Linear weight, input-major (bf16 or f32)
    # b2_ref:    (1, H)        f32
    # out_ref:   (tile_n, H)

    # Sinusoid embedding in f32 (VPU/EUP).
    args = t_ref[...] * freqs_ref[...]                       # (tile_n, half)
    # emb = [cos | sin]: lane-aligned concat (half is a multiple of 128 at the
    # module default), then ONE K=D dot -> single pass on the 256-wide
    # contraction of v6e/v7x MXUs (equivalent to two K=half passes on v5e).
    emb = jnp.concatenate([jnp.cos(args), jnp.sin(args)], axis=-1)

    # Linear 1: bf16 operands on the MXU, f32 accumulate, f32 bias add.
    h = (jnp.dot(emb.astype(w1_ref.dtype), w1_ref[...],
                 preferred_element_type=jnp.float32)
         + b1_ref[...])

    # SiLU in f32: exp and approx reciprocal both ride the EUP slot.
    h = h * pl.reciprocal(1.0 + jnp.exp(-h), approx=True)

    # Linear 2.
    out = (jnp.dot(h.astype(w2_ref.dtype), w2_ref[...],
                   preferred_element_type=jnp.float32)
           + b2_ref[...])
    out_ref[...] = out.astype(out_ref.dtype)


def timestep_embedder_forward(t, w1, b1, w2, b2, *, max_period=10000.0,
                              tile_n=256, out_dtype=jnp.float32):
    """Fused TimestepEmbedder forward.

    t:  (N,) float timesteps (may be fractional).
    w1: (D, H)  first Linear weight, input-major (y = x @ W + b, i.e. torch weight.T).
        Pass bf16 weights to halve weight DMA; math accumulates in f32 either way.
    b1: (H,)
    w2: (H, H)  second Linear weight, input-major
    b2: (H,)
    Returns (N, H) in `out_dtype` (set bf16 if downstream consumes bf16 to
    halve the output writeback).
    """
    D, H = w1.shape
    assert D % 2 == 0, "frequency_embedding_size must be even"
    # TODO(synk): odd frequency_embedding_size (torch pads one zero column) not implemented.
    half = D // 2
    N = t.shape[0]

    # Constant frequency row (matches the torch buffer math exactly).
    freqs = jnp.exp(-math.log(max_period) *
                    jnp.arange(half, dtype=jnp.float32) / half)[None, :]  # (1, half)

    # Tile the batch: sublane-aligned tiles, and at least 2 grid steps whenever
    # N > 8 so the "parallel" axis feeds both v7x TensorCores.
    tile_n = min(tile_n, max(8, 8 * pl.cdiv((N + 1) // 2, 8)))
    n_pad = pl.cdiv(N, tile_n) * tile_n
    t2 = jnp.zeros((n_pad, 1), jnp.float32).at[:N, 0].set(t.astype(jnp.float32))

    # VMEM budget: (possibly double-buffered) resident weights + double-buffered
    # output tile + small vectors. Only raise the scoped limit when needed and
    # never past v7x's 64 MiB physical VMEM per TensorCore.
    w_bytes = (D * H * jnp.dtype(w1.dtype).itemsize
               + H * H * jnp.dtype(w2.dtype).itemsize)
    est = 2 * w_bytes + 2 * tile_n * H * 4 + 4 * H * 4 + 2 * half * 4 + (4 << 20)
    vmem_limit = min(est, 64 << 20) if est > (30 << 20) else None

    out = pl.pallas_call(
        timestep_embedder_kernel,
        out_shape=jax.ShapeDtypeStruct((n_pad, H), out_dtype),
        grid_spec=pltpu.PrefetchScalarGridSpec(
            num_scalar_prefetch=0,
            grid=(n_pad // tile_n,),
            in_specs=[
                pl.BlockSpec((tile_n, 1), lambda i: (i, 0)),   # t tile
                pl.BlockSpec((1, half),   lambda i: (0, 0)),   # freqs (resident)
                pl.BlockSpec((D, H),      lambda i: (0, 0)),   # W1 (resident)
                pl.BlockSpec((1, H),      lambda i: (0, 0)),   # b1
                pl.BlockSpec((H, H),      lambda i: (0, 0)),   # W2 (resident)
                pl.BlockSpec((1, H),      lambda i: (0, 0)),   # b2
            ],
            out_specs=pl.BlockSpec((tile_n, H), lambda i: (i, 0)),
        ),
        compiler_params=pltpu.CompilerParams(
            dimension_semantics=("parallel",),
            vmem_limit_bytes=vmem_limit),
    )(t2, freqs, w1, b1.astype(jnp.float32)[None, :], w2,
      b2.astype(jnp.float32)[None, :])

    return out[:N]


def _reference(t, w1, b1, w2, b2, max_period=10000.0):
    """Pure-JAX replica of the PyTorch TimestepEmbedder forward (f32)."""
    D = w1.shape[0]
    half = D // 2
    freqs = jnp.exp(-math.log(max_period) *
                    jnp.arange(half, dtype=jnp.float32) / half)
    args = t.astype(jnp.float32)[:, None] * freqs[None]
    emb = jnp.concatenate([jnp.cos(args), jnp.sin(args)], axis=-1)
    h = emb @ w1 + b1
    h = h * jax.nn.sigmoid(h)
    return h @ w2 + b2


if __name__ == "__main__":
    key = jax.random.PRNGKey(0)
    N = 8                       # batch of timesteps
    freq_emb_size = 256         # module default frequency_embedding_size
    hidden = 32                 # small hidden_size for the test

    k_t, k_w1, k_b1, k_w2, k_b2 = jax.random.split(key, 5)
    t = jax.random.uniform(k_t, (N,), jnp.float32, 0.0, 1000.0)
    w1 = 0.02 * jax.random.normal(k_w1, (freq_emb_size, hidden), jnp.float32)
    b1 = 0.02 * jax.random.normal(k_b1, (hidden,), jnp.float32)
    w2 = 0.02 * jax.random.normal(k_w2, (hidden, hidden), jnp.float32)
    b2 = 0.02 * jax.random.normal(k_b2, (hidden,), jnp.float32)

    # Weights stored in bf16 (model compute dtype) -> half the weight DMA; the
    # MXU accumulates in f32 and biases/activations stay f32 inside the kernel.
    out = timestep_embedder_forward(
        t, w1.astype(jnp.bfloat16), b1, w2.astype(jnp.bfloat16), b2)
    out = jax.block_until_ready(out)

    out_ref = _reference(t, w1, b1, w2, b2)
    assert out.shape == (N, hidden), out.shape
    # Tolerance accounts for bf16 MXU operands vs the f32 XLA reference.
    assert jnp.allclose(out, out_ref, atol=2e-3, rtol=2e-3), \
        float(jnp.max(jnp.abs(out - out_ref)))

    print("KERNEL_OK")
</pallas_src>

<mosaic_0001>
module attributes {stable_mosaic.version = 11 : i64} {
  func.func @timestep_embedder_kernel(%arg0: i32, %arg1: memref<8x1xf32, #tpu.memory_space<vmem>>, %arg2: memref<1x128xf32, #tpu.memory_space<vmem>>, %arg3: memref<256x32xbf16, #tpu.memory_space<vmem>>, %arg4: memref<1x32xf32, #tpu.memory_space<vmem>>, %arg5: memref<32x32xbf16, #tpu.memory_space<vmem>>, %arg6: memref<1x32xf32, #tpu.memory_space<vmem>>, %arg7: memref<8x32xf32, #tpu.memory_space<vmem>>) attributes {dimension_semantics = [#tpu.dimension_semantics<parallel>], iteration_bounds = array<i64: 1>, scalar_prefetch = 0 : i64, scratch_operands = 0 : i64, tpu.core_type = #tpu.core_type<tc>, window_params = [{transform_indices = @transform_0, window_bounds = array<i64: 8, 1>}, {pipeline_mode = #tpu.pipeline_mode<synchronous>, transform_indices = @transform_1, window_bounds = array<i64: 1, 128>}, {pipeline_mode = #tpu.pipeline_mode<synchronous>, transform_indices = @transform_2, window_bounds = array<i64: 256, 32>}, {pipeline_mode = #tpu.pipeline_mode<synchronous>, transform_indices = @transform_3, window_bounds = array<i64: 1, 32>}, {pipeline_mode = #tpu.pipeline_mode<synchronous>, transform_indices = @transform_4, window_bounds = array<i64: 32, 32>}, {pipeline_mode = #tpu.pipeline_mode<synchronous>, transform_indices = @transform_5, window_bounds = array<i64: 1, 32>}, {transform_indices = @transform_6, window_bounds = array<i64: 8, 32>}]} {
    %c0 = arith.constant 0 : index
    %c0_0 = arith.constant 0 : index
    %0 = vector.load %arg1[%c0, %c0_0] : memref<8x1xf32, #tpu.memory_space<vmem>>, vector<8x1xf32>
    %c0_1 = arith.constant 0 : index
    %c0_2 = arith.constant 0 : index
    %1 = vector.load %arg2[%c0_1, %c0_2] : memref<1x128xf32, #tpu.memory_space<vmem>>, vector<1x128xf32>
    %2 = vector.broadcast %0 : vector<8x1xf32> to vector<8x128xf32>
    %3 = vector.broadcast %1 : vector<1x128xf32> to vector<8x128xf32>
    %4 = arith.mulf %2, %3 : vector<8x128xf32>
    %5 = math.cos %4 : vector<8x128xf32>
    %6 = math.sin %4 : vector<8x128xf32>
    %7 = tpu.concatenate %5, %6 in 1 : vector<8x128xf32>, vector<8x128xf32> -> vector<8x256xf32>
    %8 = arith.truncf %7 : vector<8x256xf32> to vector<8x256xbf16>
    %c0_3 = arith.constant 0 : index
    %c0_4 = arith.constant 0 : index
    %9 = vector.load %arg3[%c0_3, %c0_4] : memref<256x32xbf16, #tpu.memory_space<vmem>>, vector<256x32xbf16>
    %cst = arith.constant dense<0.000000e+00> : vector<8x32xf32>
    %10 = tpu.matmul %8, %9, %cst {dimension_numbers = #tpu.dot_dimension_numbers<[1], [0], [0], [1], [0, 0, 1, 1], [], []>} : vector<8x256xbf16>, vector<256x32xbf16>, vector<8x32xf32> -> vector<8x32xf32>
    %c0_5 = arith.constant 0 : index
    %c0_6 = arith.constant 0 : index
    %11 = vector.load %arg4[%c0_5, %c0_6] : memref<1x32xf32, #tpu.memory_space<vmem>>, vector<1x32xf32>
    %12 = vector.broadcast %11 : vector<1x32xf32> to vector<8x32xf32>
    %13 = arith.addf %10, %12 : vector<8x32xf32>
    %cst_7 = arith.constant 0.000000e+00 : f32
    %14 = vector.broadcast %cst_7 : f32 to vector<8x32xf32>
    %15 = arith.subf %14, %13 : vector<8x32xf32>
    %16 = math.exp %15 : vector<8x32xf32>
    %cst_8 = arith.constant 1.000000e+00 : f32
    %17 = vector.broadcast %cst_8 : f32 to vector<8x32xf32>
    %18 = arith.addf %17, %16 : vector<8x32xf32>
    %19 = tpu.reciprocal %18 {approx = true} : vector<8x32xf32> -> vector<8x32xf32>
    %20 = arith.mulf %13, %19 : vector<8x32xf32>
    %21 = arith.truncf %20 : vector<8x32xf32> to vector<8x32xbf16>
    %c0_9 = arith.constant 0 : index
    %c0_10 = arith.constant 0 : index
    %22 = vector.load %arg5[%c0_9, %c0_10] : memref<32x32xbf16, #tpu.memory_space<vmem>>, vector<32x32xbf16>
    %cst_11 = arith.constant dense<0.000000e+00> : vector<8x32xf32>
    %23 = tpu.matmul %21, %22, %cst_11 {dimension_numbers = #tpu.dot_dimension_numbers<[1], [0], [0], [1], [0, 0, 1, 1], [], []>} : vector<8x32xbf16>, vector<32x32xbf16>, vector<8x32xf32> -> vector<8x32xf32>
    %c0_12 = arith.constant 0 : index
    %c0_13 = arith.constant 0 : index
    %24 = vector.load %arg6[%c0_12, %c0_13] : memref<1x32xf32, #tpu.memory_space<vmem>>, vector<1x32xf32>
    %25 = vector.broadcast %24 : vector<1x32xf32> to vector<8x32xf32>
    %26 = arith.addf %23, %25 : vector<8x32xf32>
    %c0_14 = arith.constant 0 : index
    %c0_15 = arith.constant 0 : index
    %27 = vector.load %arg7[%c0_14, %c0_15] : memref<8x32xf32, #tpu.memory_space<vmem>>, vector<8x32xf32>
    tpu.vector_store %arg7[%c0_14, %c0_15], %26 {strides = array<i32>} : memref<8x32xf32, #tpu.memory_space<vmem>>, vector<8x32xf32>,
    return
  }
  func.func @transform_0(%arg0: i32) -> (i32, i32) {
    %c0_i32 = arith.constant 0 : i32
    %c0_i32_0 = arith.constant 0 : i32
    return %arg0, %c0_i32 : i32, i32
  }
  func.func @transform_1(%arg0: i32) -> (i32, i32) {
    %c0_i32 = arith.constant 0 : i32
    %c0_i32_0 = arith.constant 0 : i32
    %c0_i32_1 = arith.constant 0 : i32
    return %c0_i32, %c0_i32_0 : i32, i32
  }
  func.func @transform_2(%arg0: i32) -> (i32, i32) {
    %c0_i32 = arith.constant 0 : i32
    %c0_i32_0 = arith.constant 0 : i32
    %c0_i32_1 = arith.constant 0 : i32
    return %c0_i32, %c0_i32_0 : i32, i32
  }
  func.func @transform_3(%arg0: i32) -> (i32, i32) {
    %c0_i32 = arith.constant 0 : i32
    %c0_i32_0 = arith.constant 0 : i32
    %c0_i32_1 = arith.constant 0 : i32
    return %c0_i32, %c0_i32_0 : i32, i32
  }
  func.func @transform_4(%arg0: i32) -> (i32, i32) {
    %c0_i32 = arith.constant 0 : i32
    %c0_i32_0 = arith.constant 0 : i32
    %c0_i32_1 = arith.constant 0 : i32
    return %c0_i32, %c0_i32_0 : i32, i32
  }
  func.func @transform_5(%arg0: i32) -> (i32, i32) {
    %c0_i32 = arith.constant 0 : i32
    %c0_i32_0 = arith.constant 0 : i32
    %c0_i32_1 = arith.constant 0 : i32
    return %c0_i32, %c0_i32_0 : i32, i32
  }
  func.func @transform_6(%arg0: i32) -> (i32, i32) {
    %c0_i32 = arith.constant 0 : i32
    %c0_i32_0 = arith.constant 0 : i32
    return %arg0, %c0_i32 : i32, i32
  }
}

</mosaic_0001>

<llo_original>
// kernel: tpu_custom_call.1
$region0: #{tpu_custom_call.1}
  #allocation0 [shape = 'u32[]', space=smem, size = 0x4, offset = 0x4, fixed_abs, tag = 'smem constant byte address 0x4 - core index']
  #allocation1 [shape = 'u32[144,128]{1,0:T(1,128)}', space=vmem, size = 0x12000, scoped, tag = 'internal scratch']
  %s0 = inlined_call_operand.vmem [shape: f32[8,1], index: 0, kind: input, shape index: {}]
  %s1 = inlined_call_operand.vmem [shape: f32[1,128], index: 1, kind: input, shape index: {}]
  %s2 = inlined_call_operand.vmem [shape: bf16[256,32], index: 2, kind: input, shape index: {}]
  %s3 = inlined_call_operand.vmem [shape: f32[1,32], index: 3, kind: input, shape index: {}]
  %s4 = inlined_call_operand.vmem [shape: bf16[32,32], index: 4, kind: input, shape index: {}]
  %s5 = inlined_call_operand.vmem [shape: f32[1,32], index: 5, kind: input, shape index: {}]
  %s6 = inlined_call_operand.hbm [shape: f32[8,32], index: 6, kind: output, shape index: {}]
  %s7 = sld [smem:[#allocation0]]
  $region34: #{tpu_custom_call.1} parent=0
    _
  %s9 = ssub.s32 1, %s7
  %s10 = scalar_select 0, %s9, %s7
  $region1: #{tpu_custom_call.1} parent=0
    #allocation2 [shape = 'u8[4096]{0}', space=vmem, size = 0x1000, scoped, tag = 'output window, operand 0, single buffered']
    #allocation3 [shape = 's32[1]{0}', space=sflag, size = 0x4, scoped, tag = 'scoped memory for tpu_custom_call.1']
    %11 = vsyncpa [#allocation3], 0
    // Predicated region
    $region2: #{tpu_custom_call.1} parent=1 // pred_check
      _
    $region3: #{tpu_custom_call.1} parent=1 // pred_check_branch
      %13 = sbr.rel (0) target = $region5
    $region4: #{tpu_custom_call.1} parent=1 // pred_region
      _
    $region5: #{tpu_custom_call.1} parent=1 // pred_fallthru
      _
    // Predicated region
    $region6: #{tpu_custom_call.1} parent=1 // pred_check
      _
    $region7: #{tpu_custom_call.1} parent=1 // pred_check_branch
      %15 = sbr.rel (0) target = $region9
    $region8: #{tpu_custom_call.1} parent=1 // pred_region
      _
    $region9: #{tpu_custom_call.1} parent=1 // pred_fallthru
      _
    // Predicated region
    $region10: #{tpu_custom_call.1} parent=1 // pred_check
      _
    $region11: #{tpu_custom_call.1} parent=1 // pred_check_branch
      %17 = sbr.rel (0) target = $region13
    $region12: #{tpu_custom_call.1} parent=1 // pred_region
      _
    $region13: #{tpu_custom_call.1} parent=1 // pred_fallthru
      _
    // Predicated region
    $region14: #{tpu_custom_call.1} parent=1 // pred_check
      _
    $region15: #{tpu_custom_call.1} parent=1 // pred_check_branch
      %19 = sbr.rel (0) target = $region17
    $region16: #{tpu_custom_call.1} parent=1 // pred_region
      _
    $region17: #{tpu_custom_call.1} parent=1 // pred_fallthru
      _
    // Predicated region
    $region18: #{tpu_custom_call.1} parent=1 // pred_check
      _
    $region19: #{tpu_custom_call.1} parent=1 // pred_check_branch
      %21 = sbr.rel (0) target = $region21
    $region20: #{tpu_custom_call.1} parent=1 // pred_region
      _
    $region21: #{tpu_custom_call.1} parent=1 // pred_fallthru
      _
    // Predicated region
    $region22: #{tpu_custom_call.1} parent=1 // pred_check
      _
    $region23: #{tpu_custom_call.1} parent=1 // pred_check_branch
      %23 = sbr.rel (0) target = $region25
    $region24: #{tpu_custom_call.1} parent=1 // pred_region
      _
    $region25: #{tpu_custom_call.1} parent=1 // pred_fallthru
      _
    %v25 = vld [vmem:[%s0] sm:$0xff]
    %v26 = vld [vmem:[%s1] sm:$0x1]
    %28 = vset.pattern.permute.xlu0 0
    %29 = vperm.xlu0 %28, %v25
    %v30 = vpop.permute.xlu0 %29
    %v33 = vlaneseq
    %v34 = vshrl.u32 %v33, 7
    %v35 = vsub.s32 0, %v34
    %v36 = vrot.slane %v26, %v35
    %v38 = vmul.f32 %v30, %v36
    %v39 = vand.u32 2147483647, %v38
    %vm40 = vcmp.le.f32.partialorder %v39, 0.7853982
    %vm41 = vcmp.lt.s32.totalorder %v38, 0
    %v42 = vand.u32 %v38, 2139095040
    %v43 = vshrl.u32 %v42, 23
    %v44 = vsub.s32 %v43, 127
    %v45 = vand.u32 2147483647, %v38
    %v46 = vand.u32 %v45, 8388607
    %v47 = vor.u32 %v46, 8388608
    %v48 = vsub.s32 0, %v47
    %v49 = vadd.s32 %v44, 1
    %vm50 = vcmp.gt.s32.totalorder %v49, 0
    %v51 = vsel %vm50, %v49, 0
    %v52 = vshrl.u32 %v51, 5
    %v53 = vand.u32 %v51, 31
    %v54 = vsub.s32 32, %v53
    %v55 = vshrl.u32 683565275, %v54
    %v56 = vshll.u32 683565275, %v53
    %v57 = vshrl.u32 2475754826, %v54
    %v58 = vor.u32 %v56, %v57
    %v59 = vshll.u32 2475754826, %v53
    %v60 = vshrl.u32 2131351028, %v54
    %v61 = vor.u32 %v59, %v60
    %v62 = vshll.u32 2131351028, %v53
    %v63 = vshrl.u32 2102212464, %v54
    %v64 = vor.u32 %v62, %v63
    %v65 = vshll.u32 2102212464, %v53
    %v66 = vshrl.u32 920167782, %v54
    %v67 = vor.u32 %v65, %v66
    %v68 = vshll.u32 920167782, %v53
    %v69 = vshrl.u32 1326507024, %v54
    %v70 = vor.u32 %v68, %v69
    %vm71 = vcmp.lt.s32.totalorder %v52, 1
    %vm72 = vcmp.lt.s32.totalorder %v52, 2
    %vm73 = vcmp.lt.s32.totalorder %v52, 3
    %vm74 = vcmp.lt.s32.totalorder %v52, 4
    %v75 = vsel %vm71, %v55, %v58
    %v76 = vsel %vm74, %v64, 2102212464
    %v77 = vsel %vm73, %v61, %v76
    %v78 = vsel %vm72, %v75, %v77
    %v79 = vsel %vm71, %v58, %v61
    %v80 = vsel %vm74, %v67, 920167782
    %v81 = vsel %vm73, %v64, %v80
    %v82 = vsel %vm72, %v79, %v81
    %v83 = vsel %vm71, %v61, %v64
    %v84 = vsel %vm74, %v70, 1326507024
    %v85 = vsel %vm73, %v67, %v84
    %v86 = vsel %vm72, %v83, %v85
    %v87 = vshll.u32 %v47, 8
    %v88 = vmul.u32.u64.compose %v87, %v86
    %v89 = vextract.low.u32 %v88
    %v90 = vextract.high.u32 %v88
    %v91 = vmul.u32.u64.compose %v87, %v82
    %v92 = vextract.low.u32 %v91
    %v93 = vextract.high.u32 %v91
    %v94 = vmul.u32 %v87, %v78
    %v95 = vadd.s32 %v90, %v92
    %vm96 = vc.u32 %v90, %v92
    %v97 = vadd.s32 %v93, 1
    %v98 = vsel %vm96, %v97, %v93
    %v99 = vadd.s32 %v94, %v98
    %v100 = vadd.s32 %v99, 536870912
    %v101 = vshrl.u32 %v100, 30
    %v102 = vshll.u32 %v101, 30
    %v103 = vsub.s32 %v99, %v102
    %vm104 = vcmp.lt.s32.totalorder %v103, 0
    %v105 = vsub.s32 0, %v103
    %v106 = vsel %vm104, %v105, %v103
    %v107 = vclz %v106
    %v108 = vsub.s32 %v107, 2
    %vm109 = vcmp.gt.s32.totalorder 0, %v108
    %v110 = vsel %vm109, 0, %v108
    %v111 = vsub.s32 32, %v110
    %v112 = vshll.u32 %v103, %v110
    %v113 = vshrl.u32 %v95, %v111
    %v114 = vor.u32 %v112, %v113
    %v115 = vsub.s32 4294967266, %v110
    %v116 = vadd.s32 %v115, 127
    %v117 = vshll.u32 %v116, 23
    %v118 = vor.u32 4788187, %v117
    %v119 = vand.u32 2147483647, %v118
    %v121 = vcvt.s32.f32 %v114
    %v122 = vmul.f32 %v121, %v119
    %v123 = vxor.u32 %v122, 2147483648
    %v124 = vsel %vm41, %v123, %v122
    %v125 = vsub.s32 4, %v101
    %v126 = vsel %vm41, %v125, %v101
    %v127 = vsel %vm40, %v38, %v124
    %v128 = vsel %vm40, 0, %v126
    %v129 = vcosq.f32.pop %v127
    %v130 = vsinq.f32.pop %v127
    %vm131 = vweird.f32 %v38
    %v132 = vand.u32 %v128, 3
    %vm133 = vcmp.lt.s32.totalorder %v132, 2
    %vm134 = vcmp.eq.s32.totalorder %v132, 0
    %v135 = vxor.u32 %v130, 2147483648
    %v136 = vsel %vm134, %v129, %v135
    %vm137 = vcmp.eq.s32.totalorder %v132, 2
    %v138 = vxor.u32 %v129, 2147483648
    %v139 = vsel %vm137, %v138, %v130
    %v140 = vsel %vm133, %v136, %v139
    %v141 = vsel %vm131, nan, %v140
    %v142 = vand.u32 2147483647, %v38
    %vm143 = vcmp.le.f32.partialorder %v142, 0.7853982
    %vm144 = vcmp.lt.s32.totalorder %v38, 0
    %v145 = vand.u32 %v38, 2139095040
    %v146 = vshrl.u32 %v145, 23
    %v147 = vsub.s32 %v146, 127
    %v148 = vand.u32 2147483647, %v38
    %v149 = vand.u32 %v148, 8388607
    %v150 = vor.u32 %v149, 8388608
    %v151 = vsub.s32 0, %v150
    %v152 = vadd.s32 %v147, 1
    %vm153 = vcmp.gt.s32.totalorder %v152, 0
    %v154 = vsel %vm153, %v152, 0
    %v155 = vshrl.u32 %v154, 5
    %v156 = vand.u32 %v154, 31
    %v157 = vsub.s32 32, %v156
    %v158 = vshrl.u32 683565275, %v157
    %v159 = vshll.u32 683565275, %v156
    %v160 = vshrl.u32 2475754826, %v157
    %v161 = vor.u32 %v159, %v160
    %v162 = vshll.u32 2475754826, %v156
    %v163 = vshrl.u32 2131351028, %v157
    %v164 = vor.u32 %v162, %v163
    %v165 = vshll.u32 2131351028, %v156
    %v166 = vshrl.u32 2102212464, %v157
    %v167 = vor.u32 %v165, %v166
    %v168 = vshll.u32 2102212464, %v156
    %v169 = vshrl.u32 920167782, %v157
    %v170 = vor.u32 %v168, %v169
    %v171 = vshll.u32 920167782, %v156
    %v172 = vshrl.u32 1326507024, %v157
    %v173 = vor.u32 %v171, %v172
    %vm174 = vcmp.lt.s32.totalorder %v155, 1
    %vm175 = vcmp.lt.s32.totalorder %v155, 2
    %vm176 = vcmp.lt.s32.totalorder %v155, 3
    %vm177 = vcmp.lt.s32.totalorder %v155, 4
    %v178 = vsel %vm174, %v158, %v161
    %v179 = vsel %vm177, %v167, 2102212464
    %v180 = vsel %vm176, %v164, %v179
    %v181 = vsel %vm175, %v178, %v180
    %v182 = vsel %vm174, %v161, %v164
    %v183 = vsel %vm177, %v170, 920167782
    %v184 = vsel %vm176, %v167, %v183
    %v185 = vsel %vm175, %v182, %v184
    %v186 = vsel %vm174, %v164, %v167
    %v187 = vsel %vm177, %v173, 1326507024
    %v188 = vsel %vm176, %v170, %v187
    %v189 = vsel %vm175, %v186, %v188
    %v190 = vshll.u32 %v150, 8
    %v191 = vmul.u32.u64.compose %v190, %v189
    %v192 = vextract.low.u32 %v191
    %v193 = vextract.high.u32 %v191
    %v194 = vmul.u32.u64.compose %v190, %v185
    %v195 = vextract.low.u32 %v194
    %v196 = vextract.high.u32 %v194
    %v197 = vmul.u32 %v190, %v181
    %v198 = vadd.s32 %v193, %v195
    %vm199 = vc.u32 %v193, %v195
    %v200 = vadd.s32 %v196, 1
    %v201 = vsel %vm199, %v200, %v196
    %v202 = vadd.s32 %v197, %v201
    %v203 = vadd.s32 %v202, 536870912
    %v204 = vshrl.u32 %v203, 30
    %v205 = vshll.u32 %v204, 30
    %v206 = vsub.s32 %v202, %v205
    %vm207 = vcmp.lt.s32.totalorder %v206, 0
    %v208 = vsub.s32 0, %v206
    %v209 = vsel %vm207, %v208, %v206
    %v210 = vclz %v209
    %v211 = vsub.s32 %v210, 2
    %vm212 = vcmp.gt.s32.totalorder 0, %v211
    %v213 = vsel %vm212, 0, %v211
    %v214 = vsub.s32 32, %v213
    %v215 = vshll.u32 %v206, %v213
    %v216 = vshrl.u32 %v198, %v214
    %v217 = vor.u32 %v215, %v216
    %v218 = vsub.s32 4294967266, %v213
    %v219 = vadd.s32 %v218, 127
    %v220 = vshll.u32 %v219, 23
    %v221 = vor.u32 4788187, %v220
    %v222 = vand.u32 2147483647, %v221
    %v224 = vcvt.s32.f32 %v217
    %v225 = vmul.f32 %v224, %v222
    %v226 = vxor.u32 %v225, 2147483648
    %v227 = vsel %vm144, %v226, %v225
    %v228 = vsub.s32 4, %v204
    %v229 = vsel %vm144, %v228, %v204
    %v230 = vsel %vm143, %v38, %v227
    %v231 = vsel %vm143, 0, %v229
    %v232 = vcosq.f32.pop %v230
    %v233 = vsinq.f32.pop %v230
    %vm234 = vweird.f32 %v38
    %v235 = vadd.s32 %v231, 3
    %v236 = vand.u32 %v235, 3
    %vm237 = vcmp.lt.s32.totalorder %v236, 2
    %vm238 = vcmp.eq.s32.totalorder %v236, 0
    %v239 = vxor.u32 %v233, 2147483648
    %v240 = vsel %vm238, %v232, %v239
    %vm241 = vcmp.eq.s32.totalorder %v236, 2
    %v242 = vxor.u32 %v232, 2147483648
    %v243 = vsel %vm241, %v242, %v233
    %v244 = vsel %vm237, %v240, %v243
    %v245 = vsel %vm234, nan, %v244
    %v246 = vpack.c.bf16 %v141, %v141
    %v247 = vpack.c.bf16 %v245, %v245
    %v248 = vld [vmem:[%s2] sm:$0xf]
    %v249 = vld [vmem:[%s2 + $0x4] sm:$0xf]
    %v250 = vld [vmem:[%s2 + $0x8] sm:$0xf]
    %v251 = vld [vmem:[%s2 + $0xc] sm:$0xf]
    %v252 = vld [vmem:[%s2 + $0x10] sm:$0xf]
    %v253 = vld [vmem:[%s2 + $0x14] sm:$0xf]
    %v254 = vld [vmem:[%s2 + $0x18] sm:$0xf]
    %v255 = vld [vmem:[%s2 + $0x1c] sm:$0xf]
    %v256 = vld [vmem:[%s2 + $0x20] sm:$0xf]
    %v257 = vld [vmem:[%s2 + $0x24] sm:$0xf]
    %v258 = vld [vmem:[%s2 + $0x28] sm:$0xf]
    %v259 = vld [vmem:[%s2 + $0x2c] sm:$0xf]
    %v260 = vld [vmem:[%s2 + $0x30] sm:$0xf]
    %v261 = vld [vmem:[%s2 + $0x34] sm:$0xf]
    %v262 = vld [vmem:[%s2 + $0x38] sm:$0xf]
    %v263 = vld [vmem:[%s2 + $0x3c] sm:$0xf]
    %v264 = vld [vmem:[%s2 + $0x40] sm:$0xf]
    %v265 = vld [vmem:[%s2 + $0x44] sm:$0xf]
    %v266 = vld [vmem:[%s2 + $0x48] sm:$0xf]
    %v267 = vld [vmem:[%s2 + $0x4c] sm:$0xf]
    %v268 = vld [vmem:[%s2 + $0x50] sm:$0xf]
    %v269 = vld [vmem:[%s2 + $0x54] sm:$0xf]
    %v270 = vld [vmem:[%s2 + $0x58] sm:$0xf]
    %v271 = vld [vmem:[%s2 + $0x5c] sm:$0xf]
    %v272 = vld [vmem:[%s2 + $0x60] sm:$0xf]
    %v273 = vld [vmem:[%s2 + $0x64] sm:$0xf]
    %v274 = vld [vmem:[%s2 + $0x68] sm:$0xf]
    %v275 = vld [vmem:[%s2 + $0x6c] sm:$0xf]
    %v276 = vld [vmem:[%s2 + $0x70] sm:$0xf]
    %v277 = vld [vmem:[%s2 + $0x74] sm:$0xf]
    %v278 = vld [vmem:[%s2 + $0x78] sm:$0xf]
    %v279 = vld [vmem:[%s2 + $0x7c] sm:$0xf]
    %v280 = vld [vmem:[%s3] sm:$0x1]
    %v282 = vlaneseq
    %v283 = vshrl.u32 %v282, 7
    %v284 = vsub.s32 0, %v283
    %v285 = vrot.slane %v280, %v284
    %v319 = vunpack.c.l.b16 %v248
    %v320 = vunpack.c.l.b16 %v249
    %v321 = vunpack.c.l.b16 %v250
    %v322 = vunpack.c.l.b16 %v251
    %v323 = vunpack.c.l.b16 %v252
    %v324 = vunpack.c.l.b16 %v253
    %v325 = vunpack.c.l.b16 %v254
    %v326 = vunpack.c.l.b16 %v255
    %v327 = vunpack.c.l.b16 %v256
    %v328 = vunpack.c.l.b16 %v257
    %v329 = vunpack.c.l.b16 %v258
    %v330 = vunpack.c.l.b16 %v259
    %v331 = vunpack.c.l.b16 %v260
    %v332 = vunpack.c.l.b16 %v261
    %v333 = vunpack.c.l.b16 %v262
    %v334 = vunpack.c.l.b16 %v263
    %v335 = vunpack.c.l.b16 %v264
    %v336 = vunpack.c.l.b16 %v265
    %v337 = vunpack.c.l.b16 %v266
    %v338 = vunpack.c.l.b16 %v267
    %v339 = vunpack.c.l.b16 %v268
    %v340 = vunpack.c.l.b16 %v269
    %v341 = vunpack.c.l.b16 %v270
    %v342 = vunpack.c.l.b16 %v271
    %v343 = vunpack.c.l.b16 %v272
    %v344 = vunpack.c.l.b16 %v273
    %v345 = vunpack.c.l.b16 %v274
    %v346 = vunpack.c.l.b16 %v275
    %v347 = vunpack.c.l.b16 %v276
    %v348 = vunpack.c.l.b16 %v277
    %v349 = vunpack.c.l.b16 %v278
    %v350 = vunpack.c.l.b16 %v279
    %v351 = vpack.c.b16 %v320, %v319
    %v352 = vpack.c.b16 %v322, %v321
    %v353 = vpack.c.b16 %v324, %v323
    %v354 = vpack.c.b16 %v326, %v325
    %v355 = vpack.c.b16 %v328, %v327
    %v356 = vpack.c.b16 %v330, %v329
    %v357 = vpack.c.b16 %v332, %v331
    %v358 = vpack.c.b16 %v334, %v333
    %v359 = vpack.c.b16 %v336, %v335
    %v360 = vpack.c.b16 %v338, %v337
    %v361 = vpack.c.b16 %v340, %v339
    %v362 = vpack.c.b16 %v342, %v341
    %v363 = vpack.c.b16 %v344, %v343
    %v364 = vpack.c.b16 %v346, %v345
    %v365 = vpack.c.b16 %v348, %v347
    %v366 = vpack.c.b16 %v350, %v349
    %383 = vmatprep.subr.bf16.mxu0 0
    %384 = vmatpush1.bf16.msra.mxu0 %v351
    %385 = vmatprep.subr.bf16.mxu0 0
    %386 = vmatpush1.bf16.msra.mxu0 %v352
    %387 = vmatprep.subr.bf16.mxu0 0
    %388 = vmatpush1.bf16.msra.mxu0 %v353
    %389 = vmatprep.subr.bf16.mxu0 0
    %390 = vmatpush1.bf16.msra.mxu0 %v354
    %391 = vmatprep.subr.bf16.mxu0 0
    %392 = vmatpush1.bf16.msra.mxu0 %v355
    %393 = vmatprep.subr.bf16.mxu0 0
    %394 = vmatpush1.bf16.msra.mxu0 %v356
    %395 = vmatprep.subr.bf16.mxu0 0
    %396 = vmatpush1.bf16.msra.mxu0 %v357
    %397 = vmatprep.subr.bf16.mxu0 0
    %398 = vmatpush1.bf16.msra.mxu0 %v358
    %399 = vmatprep.subr.bf16.mxu0 0
    %400 = vmatpush1.bf16.msra.mxu0 %v359
    %401 = vmatprep.subr.bf16.mxu0 0
    %402 = vmatpush1.bf16.msra.mxu0 %v360
    %403 = vmatprep.subr.bf16.mxu0 0
    %404 = vmatpush1.bf16.msra.mxu0 %v361
    %405 = vmatprep.subr.bf16.mxu0 0
    %406 = vmatpush1.bf16.msra.mxu0 %v362
    %407 = vmatprep.subr.bf16.mxu0 0
    %408 = vmatpush1.bf16.msra.mxu0 %v363
    %409 = vmatprep.subr.bf16.mxu0 0
    %410 = vmatpush1.bf16.msra.mxu0 %v364
    %411 = vmatprep.subr.bf16.mxu0 0
    %412 = vmatpush1.bf16.msra.mxu0 %v365
    %413 = vmatprep.subr.bf16.mxu0 0
    %414 = vmatpush1.bf16.msra.mxu0 %v366
    %415 = vmatprep.mubr.bf16.mxu0 %v247
    %416 = vmatmul.mubr.bf16.gmra.mrb[0].mxu0 %v246
    %v417 = vpop.f32.mrb[0].mxu0
    %v418 = vadd.f32 %v285, %v417
    %v419 = vpop.f32.mrb[0].mxu0
    %v420 = vpop.f32.mrb[0].mxu0
    %v421 = vpop.f32.mrb[0].mxu0
    %422 = vdwg.mxu0
    %v423 = vsub.f32 0.0, %v418
    %v424 = vmul.f32 %v423, 1.442695
    %v425 = vpow.pop %v424
    %v426 = vadd.f32 %v425, 1.0
    %v427 = vrcp.pop %v426
    %v428 = vmul.f32 %v418, %v427
    %v429 = vpack.c.bf16 %v428, %v428
    %v430 = vld [vmem:[%s4] sm:$0xf]
    %v431 = vld [vmem:[%s4 + $0x4] sm:$0xf]
    %v432 = vld [vmem:[%s4 + $0x8] sm:$0xf]
    %v433 = vld [vmem:[%s4 + $0xc] sm:$0xf]
    %v434 = vld [vmem:[%s5] sm:$0x1]
    %v436 = vlaneseq
    %v437 = vshrl.u32 %v436, 7
    %v438 = vsub.s32 0, %v437
    %v439 = vrot.slane %v434, %v438
    %v445 = vunpack.c.l.b16 %v430
    %v446 = vunpack.c.l.b16 %v431
    %v447 = vunpack.c.l.b16 %v432
    %v448 = vunpack.c.l.b16 %v433
    %v449 = vpack.c.b16 %v446, %v445
    %v450 = vpack.c.b16 %v448, %v447
    %vm453 = vcmask 261120
    %v455 = vsel %vm453, %v429, 0
    %457 = vmatprep.subr.bf16.mxu0 0
    %458 = vmatpush1.bf16.msra.mxu0 %v449
    %459 = vmatprep.subr.bf16.mxu0 0
    %460 = vmatpush1.bf16.msra.mxu0 %v450
    %461 = vmatprep.subr.bf16.mxu0 0
    %462 = vmatpush1.bf16.msra.mxu0 0
    %463 = vmatprep.subr.bf16.mxu0 0
    %464 = vmatpush1.bf16.msra.mxu0 0
    %465 = vmatprep.subr.bf16.mxu0 0
    %466 = vmatpush1.bf16.msra.mxu0 0
    %467 = vmatprep.subr.bf16.mxu0 0
    %468 = vmatpush1.bf16.msra.mxu0 0
    %469 = vmatprep.subr.bf16.mxu0 0
    %470 = vmatpush1.bf16.msra.mxu0 0
    %471 = vmatprep.subr.bf16.mxu0 0
    %472 = vmatpush1.bf16.msra.mxu0 0
    %473 = vmatprep.subr.bf16.mxu0 0
    %474 = vmatpush1.bf16.msra.mxu0 0
    %475 = vmatprep.subr.bf16.mxu0 0
    %476 = vmatpush1.bf16.msra.mxu0 0
    %477 = vmatprep.subr.bf16.mxu0 0
    %478 = vmatpush1.bf16.msra.mxu0 0
    %479 = vmatprep.subr.bf16.mxu0 0
    %480 = vmatpush1.bf16.msra.mxu0 0
    %481 = vmatprep.subr.bf16.mxu0 0
    %482 = vmatpush1.bf16.msra.mxu0 0
    %483 = vmatprep.subr.bf16.mxu0 0
    %484 = vmatpush1.bf16.msra.mxu0 0
    %485 = vmatprep.subr.bf16.mxu0 0
    %486 = vmatpush1.bf16.msra.mxu0 0
    %487 = vmatprep.subr.bf16.mxu0 0
    %488 = vmatpush1.bf16.msra.mxu0 0
    %489 = vmatprep.mubr.bf16.mxu0 0
    %490 = vmatmul.mubr.bf16.gmra.mrb[0].mxu0 %v455
    %v491 = vpop.f32.mrb[0].mxu0
    %v492 = vadd.f32 %v439, %v491
    %v493 = vpop.f32.mrb[0].mxu0
    %v494 = vpop.f32.mrb[0].mxu0
    %v495 = vpop.f32.mrb[0].mxu0
    %496 = vdwg.mxu0
    %497 = vst.msk [vmem:[#allocation2] sm:$0xff] %vm453, %v492
    // Predicated region
    $region26: #{tpu_custom_call.1} parent=1 // pred_check
      _
    $region27: #{tpu_custom_call.1} parent=1 // pred_check_branch
      %499 = sbr.rel (0) target = $region29
    $region28: #{tpu_custom_call.1} parent=1 // pred_region
      %s501 = ssub.s32 128, 128
      %502 = vsyncadd [#allocation3], %s501
      %s504 = sshll.u32 [#allocation2], 4
      %s505 = int_to_ptr.vmem [resolvable:$true] %s504
      %507 = dma.vmem_to_hbm [thread:$0]  %s505, 128, %s6, [#allocation3]
    $region29: #{tpu_custom_call.1} parent=1 // pred_fallthru
      _
    // Predicated region
    $region30: #{tpu_custom_call.1} parent=1 // pred_check
      _
    $region31: #{tpu_custom_call.1} parent=1 // pred_check_branch
      %509 = sbr.rel (0) target = $region33
    $region32: #{tpu_custom_call.1} parent=1 // pred_region
      %510 = dma.done [#allocation3], 128
    $region33: #{tpu_custom_call.1} parent=1 // pred_fallthru
      _
    %511 = vsyncpa [#allocation3], 1

</llo_original>
